<compile_context>
chip_gen: v7x
topology: tpu7x:2x2x1
jax: 0.10.0
libtpu: 0.0.40
codegen_flags: <defaults>
</compile_context>

<pallas_src>
import jax
import jax.numpy as jnp
from jax.experimental import pallas as pl
from jax.experimental.pallas import tpu as pltpu

EPS = 1e-5  # PyTorch BatchNorm1d default eps


def attention_unit5_kernel(
    vx_ref, ax_ref,          # (1, B, D) f32 — one call's batch per grid step
    w1v_ref, w1a_ref,        # (D, D) bf16 halves of the fc1 weight (2D -> D)
    b1_ref,                  # (1, D) f32
    w2_ref,                  # (D, Npad) bf16, fc2 weight zero-padded to lane width
    b2_ref,                  # (1, Npad) f32, zero-padded
    out_ref,                 # (1, B, Npad) f32
):
    # ---- fc1 on concat(vx, ax), expressed as two accumulated MXU dots ------
    vx = vx_ref[0].astype(jnp.bfloat16)          # (B, D)
    ax = ax_ref[0].astype(jnp.bfloat16)          # (B, D)
    h = (
        jnp.dot(vx, w1v_ref[...], preferred_element_type=jnp.float32)
        + jnp.dot(ax, w1a_ref[...], preferred_element_type=jnp.float32)
        + b1_ref[...]
    )
    h = jnp.maximum(h, 0.0)  # ReLU (f32 on VPU)

    # ---- BatchNorm1d, training mode, one-pass statistics -------------------
    # mean / biased var over the batch of THIS grid step (gamma=1, beta=0).
    mean = jnp.mean(h, axis=0, keepdims=True)
    mean_sq = jnp.mean(h * h, axis=0, keepdims=True)
    var = jnp.maximum(mean_sq - mean * mean, 0.0)
    h = (h - mean) * jax.lax.rsqrt(var + EPS)

    # ---- fc2 (padded to lane-dense width) + ReLU ----------------------------
    out = (
        jnp.dot(h.astype(jnp.bfloat16), w2_ref[...], preferred_element_type=jnp.float32)
        + b2_ref[...]
    )
    out_ref[0] = jnp.maximum(out, 0.0)


def attention_unit5_forward(vx, ax, params):
    """vx, ax: (B, D) for a single call, or (T, B, D) for T independent calls.

    BatchNorm statistics are computed per call (per leading-T slice), matching
    the PyTorch module evaluated once per slice.
    """
    squeeze = vx.ndim == 2
    if squeeze:
        vx = vx[None]
        ax = ax[None]
    T, B, D = vx.shape
    out_dim = params["out_dim"]
    n_pad = params["w2"].shape[1]

    in_specs = [
        # Per-step activations: new block every grid step.
        pl.BlockSpec((1, B, D), lambda t: (t, 0, 0)),
        pl.BlockSpec((1, B, D), lambda t: (t, 0, 0)),
        # Weights / biases: constant block index -> DMA'd once, VMEM-resident
        # across all T grid steps.
        pl.BlockSpec((D, D), lambda t: (0, 0)),
        pl.BlockSpec((D, D), lambda t: (0, 0)),
        pl.BlockSpec((1, D), lambda t: (0, 0)),
        pl.BlockSpec((D, n_pad), lambda t: (0, 0)),
        pl.BlockSpec((1, n_pad), lambda t: (0, 0)),
    ]
    out_specs = pl.BlockSpec((1, B, n_pad), lambda t: (t, 0, 0))

    flops = T * (2 * B * (2 * D) * D + 2 * B * D * n_pad)
    bytes_accessed = (
        2 * T * B * D * 4                       # vx, ax (f32 in)
        + 2 * D * D * 2 + D * n_pad * 2         # bf16 weights (fetched once)
        + (D + n_pad) * 4                       # biases
        + T * B * n_pad * 4                     # f32 out
    )

    out = pl.pallas_call(
        attention_unit5_kernel,
        out_shape=jax.ShapeDtypeStruct((T, B, n_pad), jnp.float32),
        grid=(T,),
        in_specs=in_specs,
        out_specs=out_specs,
        compiler_params=pltpu.CompilerParams(
            # Independent grid steps -> shard across both v7x TensorCores.
            dimension_semantics=("parallel",),
        ),
        cost_estimate=pl.CostEstimate(
            flops=flops, transcendentals=T * D, bytes_accessed=bytes_accessed
        ),
    )(vx, ax, params["w1v"], params["w1a"], params["b1"], params["w2"], params["b2"])

    out = out[..., :out_dim]  # drop zero-padded lanes (pure glue)
    if squeeze:
        out = out[0]
    return out


def make_params(key, in_feature_dim=128, out_feature_dim=32):
    """PyTorch-Linear-style uniform(-1/sqrt(fan_in), 1/sqrt(fan_in)) init."""
    ks = jax.random.split(key, 4)
    D = in_feature_dim
    n_pad = 128 * pl.cdiv(out_feature_dim, 128)  # lane-dense output width

    # fc1: (2D -> D), stored as (2D, D) so forward is x @ W
    bound1 = 1.0 / jnp.sqrt(jnp.float32(2 * D))
    w1 = jax.random.uniform(ks[0], (2 * D, D), jnp.float32, -bound1, bound1)
    b1 = jax.random.uniform(ks[1], (1, D), jnp.float32, -bound1, bound1)

    # fc2: (D -> out), zero-padded to (D, n_pad)
    bound2 = 1.0 / jnp.sqrt(jnp.float32(D))
    w2 = jax.random.uniform(ks[2], (D, out_feature_dim), jnp.float32, -bound2, bound2)
    b2 = jax.random.uniform(ks[3], (1, out_feature_dim), jnp.float32, -bound2, bound2)
    w2_pad = jnp.zeros((D, n_pad), jnp.float32).at[:, :out_feature_dim].set(w2)
    b2_pad = jnp.zeros((1, n_pad), jnp.float32).at[:, :out_feature_dim].set(b2)

    return {
        "w1v": w1[:D, :].astype(jnp.bfloat16),   # visual half of fc1 weight
        "w1a": w1[D:, :].astype(jnp.bfloat16),   # audio half of fc1 weight
        "b1": b1,                                # f32
        "w2": w2_pad.astype(jnp.bfloat16),       # bf16, lane-padded
        "b2": b2_pad,                            # f32, lane-padded
        "out_dim": out_feature_dim,
    }


def attention_unit5_reference(vx, ax, p):
    """Pure-JAX reference replaying the identical precision path.

    Works for (B, D) or (T, B, D) inputs; BN stats per leading slice (axis=-2).
    """
    h = (
        jnp.dot(vx.astype(jnp.bfloat16), p["w1v"], preferred_element_type=jnp.float32)
        + jnp.dot(ax.astype(jnp.bfloat16), p["w1a"], preferred_element_type=jnp.float32)
        + p["b1"]
    )
    h = jnp.maximum(h, 0.0)
    mean = jnp.mean(h, axis=-2, keepdims=True)
    var = jnp.mean((h - mean) ** 2, axis=-2, keepdims=True)
    h = (h - mean) * jax.lax.rsqrt(var + EPS)
    out = (
        jnp.dot(h.astype(jnp.bfloat16), p["w2"], preferred_element_type=jnp.float32)
        + p["b2"]
    )
    return jnp.maximum(out, 0.0)[..., : p["out_dim"]]


if __name__ == "__main__":
    key = jax.random.PRNGKey(0)
    k_vx, k_ax, k_p = jax.random.split(key, 3)

    # B=16 -> full packed bf16 (16,128) sublane tile, no padding, clean BN stats.
    T, B, D_IN, D_OUT = 4, 16, 128, 32
    vx = jax.random.normal(k_vx, (T, B, D_IN), jnp.float32)
    ax = jax.random.normal(k_ax, (T, B, D_IN), jnp.float32)
    params = make_params(k_p, in_feature_dim=D_IN, out_feature_dim=D_OUT)

    # Multi-call path: T independent forwards amortized over one pallas_call.
    out = attention_unit5_forward(vx, ax, params)
    out = jax.block_until_ready(out)
    ref = attention_unit5_reference(vx, ax, params)
    assert out.shape == (T, B, D_OUT) and out.dtype == jnp.float32
    assert jnp.allclose(out, ref, rtol=2e-2, atol=2e-2), "mismatch vs reference (batched)"

    # Single-call path (matches the PyTorch module's forward(vx, ax) signature).
    out1 = attention_unit5_forward(vx[0], ax[0], params)
    out1 = jax.block_until_ready(out1)
    ref1 = attention_unit5_reference(vx[0], ax[0], params)
    assert out1.shape == (B, D_OUT)
    assert jnp.allclose(out1, ref1, rtol=2e-2, atol=2e-2), "mismatch vs reference (single)"
    assert jnp.allclose(out1, out[0], rtol=2e-2, atol=2e-2), "batched/single disagree"

    print("KERNEL_OK")
</pallas_src>

<mosaic_0001>
module attributes {stable_mosaic.version = 11 : i64} {
  func.func @attention_unit5_kernel(%arg0: i32, %arg1: memref<1x16x128xf32, #tpu.memory_space<vmem>>, %arg2: memref<1x16x128xf32, #tpu.memory_space<vmem>>, %arg3: memref<128x128xbf16, #tpu.memory_space<vmem>>, %arg4: memref<128x128xbf16, #tpu.memory_space<vmem>>, %arg5: memref<1x128xf32, #tpu.memory_space<vmem>>, %arg6: memref<128x128xbf16, #tpu.memory_space<vmem>>, %arg7: memref<1x128xf32, #tpu.memory_space<vmem>>, %arg8: memref<1x16x128xf32, #tpu.memory_space<vmem>>) attributes {dimension_semantics = [#tpu.dimension_semantics<parallel>], iteration_bounds = array<i64: 4>, scalar_prefetch = 0 : i64, scratch_operands = 0 : i64, tpu.core_type = #tpu.core_type<tc>, window_params = [{transform_indices = @transform_0, window_bounds = array<i64: 1, 16, 128>}, {transform_indices = @transform_1, window_bounds = array<i64: 1, 16, 128>}, {pipeline_mode = #tpu.pipeline_mode<synchronous>, transform_indices = @transform_2, window_bounds = array<i64: 128, 128>}, {pipeline_mode = #tpu.pipeline_mode<synchronous>, transform_indices = @transform_3, window_bounds = array<i64: 128, 128>}, {pipeline_mode = #tpu.pipeline_mode<synchronous>, transform_indices = @transform_4, window_bounds = array<i64: 1, 128>}, {pipeline_mode = #tpu.pipeline_mode<synchronous>, transform_indices = @transform_5, window_bounds = array<i64: 128, 128>}, {pipeline_mode = #tpu.pipeline_mode<synchronous>, transform_indices = @transform_6, window_bounds = array<i64: 1, 128>}, {transform_indices = @transform_7, window_bounds = array<i64: 1, 16, 128>}]} {
    %c0 = arith.constant 0 : index
    %c0_0 = arith.constant 0 : index
    %c0_1 = arith.constant 0 : index
    %0 = vector.load %arg1[%c0, %c0_0, %c0_1] : memref<1x16x128xf32, #tpu.memory_space<vmem>>, vector<1x16x128xf32>
    %1 = vector.shape_cast %0 : vector<1x16x128xf32> to vector<16x128xf32>
    %2 = arith.truncf %1 : vector<16x128xf32> to vector<16x128xbf16>
    %c0_2 = arith.constant 0 : index
    %c0_3 = arith.constant 0 : index
    %c0_4 = arith.constant 0 : index
    %3 = vector.load %arg2[%c0_2, %c0_3, %c0_4] : memref<1x16x128xf32, #tpu.memory_space<vmem>>, vector<1x16x128xf32>
    %4 = vector.shape_cast %3 : vector<1x16x128xf32> to vector<16x128xf32>
    %5 = arith.truncf %4 : vector<16x128xf32> to vector<16x128xbf16>
    %c0_5 = arith.constant 0 : index
    %c0_6 = arith.constant 0 : index
    %6 = vector.load %arg3[%c0_5, %c0_6] : memref<128x128xbf16, #tpu.memory_space<vmem>>, vector<128x128xbf16>
    %cst = arith.constant dense<0.000000e+00> : vector<16x128xf32>
    %7 = tpu.matmul %2, %6, %cst {dimension_numbers = #tpu.dot_dimension_numbers<[1], [0], [0], [1], [0, 0, 1, 1], [], []>} : vector<16x128xbf16>, vector<128x128xbf16>, vector<16x128xf32> -> vector<16x128xf32>
    %c0_7 = arith.constant 0 : index
    %c0_8 = arith.constant 0 : index
    %8 = vector.load %arg4[%c0_7, %c0_8] : memref<128x128xbf16, #tpu.memory_space<vmem>>, vector<128x128xbf16>
    %cst_9 = arith.constant dense<0.000000e+00> : vector<16x128xf32>
    %9 = tpu.matmul %5, %8, %cst_9 {dimension_numbers = #tpu.dot_dimension_numbers<[1], [0], [0], [1], [0, 0, 1, 1], [], []>} : vector<16x128xbf16>, vector<128x128xbf16>, vector<16x128xf32> -> vector<16x128xf32>
    %10 = arith.addf %7, %9 : vector<16x128xf32>
    %c0_10 = arith.constant 0 : index
    %c0_11 = arith.constant 0 : index
    %11 = vector.load %arg5[%c0_10, %c0_11] : memref<1x128xf32, #tpu.memory_space<vmem>>, vector<1x128xf32>
    %12 = vector.broadcast %11 : vector<1x128xf32> to vector<16x128xf32>
    %13 = arith.addf %10, %12 : vector<16x128xf32>
    %cst_12 = arith.constant 0.000000e+00 : f32
    %14 = vector.broadcast %cst_12 : f32 to vector<16x128xf32>
    %15 = arith.maximumf %13, %14 : vector<16x128xf32>
    %cst_13 = arith.constant dense<0.000000e+00> : vector<128xf32>
    %16 = vector.multi_reduction <add>, %15, %cst_13 [0] : vector<16x128xf32> to vector<128xf32>
    %17 = vector.shape_cast %16 : vector<128xf32> to vector<1x128xf32>
    %cst_14 = arith.constant 1.600000e+01 : f32
    %18 = vector.broadcast %cst_14 : f32 to vector<1x128xf32>
    %19 = arith.divf %17, %18 : vector<1x128xf32>
    %20 = arith.mulf %15, %15 : vector<16x128xf32>
    %cst_15 = arith.constant dense<0.000000e+00> : vector<128xf32>
    %21 = vector.multi_reduction <add>, %20, %cst_15 [0] : vector<16x128xf32> to vector<128xf32>
    %22 = vector.shape_cast %21 : vector<128xf32> to vector<1x128xf32>
    %cst_16 = arith.constant 1.600000e+01 : f32
    %23 = vector.broadcast %cst_16 : f32 to vector<1x128xf32>
    %24 = arith.divf %22, %23 : vector<1x128xf32>
    %25 = arith.mulf %19, %19 : vector<1x128xf32>
    %26 = arith.subf %24, %25 : vector<1x128xf32>
    %cst_17 = arith.constant 0.000000e+00 : f32
    %27 = vector.broadcast %cst_17 : f32 to vector<1x128xf32>
    %28 = arith.maximumf %26, %27 : vector<1x128xf32>
    %29 = vector.broadcast %19 : vector<1x128xf32> to vector<16x128xf32>
    %30 = arith.subf %15, %29 : vector<16x128xf32>
    %cst_18 = arith.constant 9.99999974E-6 : f32
    %31 = vector.broadcast %cst_18 : f32 to vector<1x128xf32>
    %32 = arith.addf %28, %31 : vector<1x128xf32>
    %33 = math.rsqrt %32 : vector<1x128xf32>
    %34 = vector.broadcast %33 : vector<1x128xf32> to vector<16x128xf32>
    %35 = arith.mulf %30, %34 : vector<16x128xf32>
    %36 = arith.truncf %35 : vector<16x128xf32> to vector<16x128xbf16>
    %c0_19 = arith.constant 0 : index
    %c0_20 = arith.constant 0 : index
    %37 = vector.load %arg6[%c0_19, %c0_20] : memref<128x128xbf16, #tpu.memory_space<vmem>>, vector<128x128xbf16>
    %cst_21 = arith.constant dense<0.000000e+00> : vector<16x128xf32>
    %38 = tpu.matmul %36, %37, %cst_21 {dimension_numbers = #tpu.dot_dimension_numbers<[1], [0], [0], [1], [0, 0, 1, 1], [], []>} : vector<16x128xbf16>, vector<128x128xbf16>, vector<16x128xf32> -> vector<16x128xf32>
    %c0_22 = arith.constant 0 : index
    %c0_23 = arith.constant 0 : index
    %39 = vector.load %arg7[%c0_22, %c0_23] : memref<1x128xf32, #tpu.memory_space<vmem>>, vector<1x128xf32>
    %40 = vector.broadcast %39 : vector<1x128xf32> to vector<16x128xf32>
    %41 = arith.addf %38, %40 : vector<16x128xf32>
    %cst_24 = arith.constant 0.000000e+00 : f32
    %42 = vector.broadcast %cst_24 : f32 to vector<16x128xf32>
    %43 = arith.maximumf %41, %42 : vector<16x128xf32>
    %c0_25 = arith.constant 0 : index
    %c0_26 = arith.constant 0 : index
    %c0_27 = arith.constant 0 : index
    %44 = vector.load %arg8[%c0_25, %c0_26, %c0_27] : memref<1x16x128xf32, #tpu.memory_space<vmem>>, vector<1x16x128xf32>
    %45 = vector.shape_cast %44 : vector<1x16x128xf32> to vector<16x128xf32>
    %46 = vector.shape_cast %43 : vector<16x128xf32> to vector<1x16x128xf32>
    tpu.vector_store %arg8[%c0_25, %c0_26, %c0_27], %46 {strides = array<i32>} : memref<1x16x128xf32, #tpu.memory_space<vmem>>, vector<1x16x128xf32>,
    return
  }
  func.func @transform_0(%arg0: i32) -> (i32, i32, i32) {
    %c0_i32 = arith.constant 0 : i32
    %c0_i32_0 = arith.constant 0 : i32
    %c0_i32_1 = arith.constant 0 : i32
    return %arg0, %c0_i32, %c0_i32_0 : i32, i32, i32
  }
  func.func @transform_1(%arg0: i32) -> (i32, i32, i32) {
    %c0_i32 = arith.constant 0 : i32
    %c0_i32_0 = arith.constant 0 : i32
    %c0_i32_1 = arith.constant 0 : i32
    return %arg0, %c0_i32, %c0_i32_0 : i32, i32, i32
  }
  func.func @transform_2(%arg0: i32) -> (i32, i32) {
    %c0_i32 = arith.constant 0 : i32
    %c0_i32_0 = arith.constant 0 : i32
    %c0_i32_1 = arith.constant 0 : i32
    return %c0_i32, %c0_i32_0 : i32, i32
  }
  func.func @transform_3(%arg0: i32) -> (i32, i32) {
    %c0_i32 = arith.constant 0 : i32
    %c0_i32_0 = arith.constant 0 : i32
    %c0_i32_1 = arith.constant 0 : i32
    return %c0_i32, %c0_i32_0 : i32, i32
  }
  func.func @transform_4(%arg0: i32) -> (i32, i32) {
    %c0_i32 = arith.constant 0 : i32
    %c0_i32_0 = arith.constant 0 : i32
    %c0_i32_1 = arith.constant 0 : i32
    return %c0_i32, %c0_i32_0 : i32, i32
  }
  func.func @transform_5(%arg0: i32) -> (i32, i32) {
    %c0_i32 = arith.constant 0 : i32
    %c0_i32_0 = arith.constant 0 : i32
    %c0_i32_1 = arith.constant 0 : i32
    return %c0_i32, %c0_i32_0 : i32, i32
  }
  func.func @transform_6(%arg0: i32) -> (i32, i32) {
    %c0_i32 = arith.constant 0 : i32
    %c0_i32_0 = arith.constant 0 : i32
    %c0_i32_1 = arith.constant 0 : i32
    return %c0_i32, %c0_i32_0 : i32, i32
  }
  func.func @transform_7(%arg0: i32) -> (i32, i32, i32) {
    %c0_i32 = arith.constant 0 : i32
    %c0_i32_0 = arith.constant 0 : i32
    %c0_i32_1 = arith.constant 0 : i32
    return %arg0, %c0_i32, %c0_i32_0 : i32, i32, i32
  }
}

</mosaic_0001>

<llo_original>
// kernel: tpu_custom_call.1
$region0: #{tpu_custom_call.1}
  #allocation0 [shape = 'u32[]', space=smem, size = 0x4, offset = 0x4, fixed_abs, tag = 'smem constant byte address 0x4 - core index']
  #allocation1 [shape = 'u32[144,128]{1,0:T(1,128)}', space=vmem, size = 0x12000, scoped, tag = 'internal scratch']
  %s0 = inlined_call_operand.hbm [shape: f32[4,16,128], index: 0, kind: input, shape index: {}]
  %s1 = inlined_call_operand.hbm [shape: f32[4,16,128], index: 1, kind: input, shape index: {}]
  %s2 = inlined_call_operand.hbm [shape: bf16[128,128], index: 2, kind: input, shape index: {}]
  %s3 = inlined_call_operand.hbm [shape: bf16[128,128], index: 3, kind: input, shape index: {}]
  %s4 = inlined_call_operand.vmem [shape: f32[1,128], index: 4, kind: input, shape index: {}]
  %s5 = inlined_call_operand.hbm [shape: bf16[128,128], index: 5, kind: input, shape index: {}]
  %s6 = inlined_call_operand.vmem [shape: f32[1,128], index: 6, kind: input, shape index: {}]
  %s7 = inlined_call_operand.hbm [shape: f32[4,16,128], index: 7, kind: output, shape index: {}]
  %s8 = sld [smem:[#allocation0]]
  $region81: #{tpu_custom_call.1} parent=0
    _
  %s10 = ssub.s32 1, %s8
  %s11 = scalar_select 0, %s10, %s8
  $region1: #{tpu_custom_call.1} parent=0
    #allocation2 [shape = 'u8[16384]{0}', space=vmem, size = 0x4000, scoped, tag = 'input window, operand 0']
    #allocation3 [shape = 's32[2]{0}', space=sflag, size = 0x8, scoped, tag = 'scoped memory for tpu_custom_call.1']
    #allocation4 [shape = 's32[2]{0}', space=sflag, size = 0x8, scoped, tag = 'scoped memory for tpu_custom_call.1']
    #allocation5 [shape = 'u8[16384]{0}', space=vmem, size = 0x4000, scoped, tag = 'input window, operand 1']
    #allocation6 [shape = 's32[2]{0}', space=sflag, size = 0x8, scoped, tag = 'scoped memory for tpu_custom_call.1']
    #allocation7 [shape = 'u8[32768]{0}', space=vmem, size = 0x8000, scoped, tag = 'input window, operand 2, single buffered']
    #allocation8 [shape = 'u8[32768]{0}', space=vmem, size = 0x8000, scoped, tag = 'input window, operand 3, single buffered']
    #allocation9 [shape = 's32[1]{0}', space=sflag, size = 0x4, scoped, tag = 'scoped memory for tpu_custom_call.1']
    #allocation10 [shape = 'u8[32768]{0}', space=vmem, size = 0x8000, scoped, tag = 'input window, operand 5, single buffered']
    #allocation11 [shape = 'u8[16384]{0}', space=vmem, size = 0x4000, scoped, tag = 'output window, operand 0']
    %12 = vsyncpa [#allocation3], 0
    %s13 = scalar_lea.sflag [#allocation3], 1
    %14 = vsyncpa %s13, 0
    %15 = vsyncpa [#allocation6], 0
    %s16 = scalar_lea.sflag [#allocation6], 1
    %17 = vsyncpa %s16, 0
    %18 = vsyncpa [#allocation9], 0
    %19 = vsyncpa [#allocation4], 0
    %s20 = scalar_lea.sflag [#allocation4], 1
    %21 = vsyncpa %s20, 0
    loop: start=0, step=1, limit=6
    $region2: #{tpu_custom_call.1} parent=1 // loop_pre_header
      _
    $region3: #{tpu_custom_call.1} parent=1 // loop_header
      %s23 = sphi 0, %s27
      %p24 = scmp.ge.s32.totalorder %s23, 6
      %s33 = sphi 0, %s35
      %s36 = sphi 0, %s33
      %s37 = sphi 0, %s36
      %s53 = sphi 0, %s37
      %s59 = sphi 0, %s61
      %s62 = sphi 0, %s59
      %s63 = sphi 0, %s62
      %s79 = sphi 0, %s63
      %s83 = sphi 0, %s83
      %s85 = sphi 0, %s83
      %s86 = sphi 0, %s85
      %s100 = sphi 0, %s86
      %s104 = sphi 0, %s104
      %s106 = sphi 0, %s104
      %s107 = sphi 0, %s106
      %s121 = sphi 0, %s107
      %s125 = sphi 0, %s125
      %s127 = sphi 0, %s125
      %s128 = sphi 0, %s127
      %s142 = sphi 0, %s128
      %s146 = sphi 0, %s146
      %s148 = sphi 0, %s146
      %s149 = sphi 0, %s148
      %s163 = sphi 0, %s149
      %s167 = sphi 0, %s167
      %s169 = sphi 0, %s167
      %s170 = sphi 0, %s169
      %s184 = sphi 0, %s170
      %s190 = sphi 0, %s192
      %s193 = sphi 0, %s190
      %s194 = sphi 0, %s193
      %s210 = sphi 0, %s194
    $region4: #{tpu_custom_call.1} parent=1 // loop_header_branch
      %26 = sbr.rel (%p24) target = $region8
    $region5: #{tpu_custom_call.1} parent=1 // loop_body
      %s28 = ssub.s32 %s23, 1
      %s29 = ssub.s32 %s23, 2
      %s30 = sadd.s32 %s23, 1
      %s31 = ssub.s32 %s23, %s30
      %p32 = scmp.eq.s32.totalorder %s31, 0
      %s34 = sadd.s32 %s33, 1
      %s35 = scalar_select %p32, %s33, %s34
      %p38 = pneg %p32
      %p39 = scmp.eq.s32.totalorder %s23, 3
      %p40 = por %p38, %p39
      %p41 = scmp.ne.s32.totalorder %s33, %s36
      %p42 = scmp.eq.s32.totalorder %s23, 0
      %p43 = por %p41, %p42
      %p44 = scmp.ne.s32.totalorder %s33, %s36
      %p45 = scmp.eq.s32.totalorder %s28, 3
      %p46 = por %p44, %p45
      %p47 = scmp.ne.s32.totalorder %s36, %s37
      %p48 = scmp.eq.s32.totalorder %s28, 0
      %p49 = por %p47, %p48
      %p50 = scmp.ne.s32.totalorder %s36, %s37
      %p51 = scmp.eq.s32.totalorder %s29, 3
      %p52 = por %p50, %p51
      %p54 = scmp.ne.s32.totalorder %s37, %s53
      %p55 = scmp.eq.s32.totalorder %s29, 0
      %p56 = por %p54, %p55
      %s57 = ssub.s32 %s23, %s30
      %p58 = scmp.eq.s32.totalorder %s57, 0
      %s60 = sadd.s32 %s59, 1
      %s61 = scalar_select %p58, %s59, %s60
      %p64 = pneg %p58
      %p65 = scmp.eq.s32.totalorder %s23, 3
      %p66 = por %p64, %p65
      %p67 = scmp.ne.s32.totalorder %s59, %s62
      %p68 = scmp.eq.s32.totalorder %s23, 0
      %p69 = por %p67, %p68
      %p70 = scmp.ne.s32.totalorder %s59, %s62
      %p71 = scmp.eq.s32.totalorder %s28, 3
      %p72 = por %p70, %p71
      %p73 = scmp.ne.s32.totalorder %s62, %s63
      %p74 = scmp.eq.s32.totalorder %s28, 0
      %p75 = por %p73, %p74
      %p76 = scmp.ne.s32.totalorder %s62, %s63
      %p77 = scmp.eq.s32.totalorder %s29, 3
      %p78 = por %p76, %p77
      %p80 = scmp.ne.s32.totalorder %s63, %s79
      %p81 = scmp.eq.s32.totalorder %s29, 0
      %p82 = por %p80, %p81
      %s84 = sadd.s32 %s83, 1
      %p87 = scmp.eq.s32.totalorder %s23, 3
      %p88 = scmp.ne.s32.totalorder %s83, %s85
      %p89 = scmp.eq.s32.totalorder %s23, 0
      %p90 = por %p88, %p89
      %p91 = scmp.ne.s32.totalorder %s83, %s85
      %p92 = scmp.eq.s32.totalorder %s28, 3
      %p93 = por %p91, %p92
      %p94 = scmp.ne.s32.totalorder %s85, %s86
      %p95 = scmp.eq.s32.totalorder %s28, 0
      %p96 = por %p94, %p95
      %p97 = scmp.ne.s32.totalorder %s85, %s86
      %p98 = scmp.eq.s32.totalorder %s29, 3
      %p99 = por %p97, %p98
      %p101 = scmp.ne.s32.totalorder %s86, %s100
      %p102 = scmp.eq.s32.totalorder %s29, 0
      %p103 = por %p101, %p102
      %s105 = sadd.s32 %s104, 1
      %p108 = scmp.eq.s32.totalorder %s23, 3
      %p109 = scmp.ne.s32.totalorder %s104, %s106
      %p110 = scmp.eq.s32.totalorder %s23, 0
      %p111 = por %p109, %p110
      %p112 = scmp.ne.s32.totalorder %s104, %s106
      %p113 = scmp.eq.s32.totalorder %s28, 3
      %p114 = por %p112, %p113
      %p115 = scmp.ne.s32.totalorder %s106, %s107
      %p116 = scmp.eq.s32.totalorder %s28, 0
      %p117 = por %p115, %p116
      %p118 = scmp.ne.s32.totalorder %s106, %s107
      %p119 = scmp.eq.s32.totalorder %s29, 3
      %p120 = por %p118, %p119
      %p122 = scmp.ne.s32.totalorder %s107, %s121
      %p123 = scmp.eq.s32.totalorder %s29, 0
      %p124 = por %p122, %p123
      %s126 = sadd.s32 %s125, 1
      %p129 = scmp.eq.s32.totalorder %s23, 3
      %p130 = scmp.ne.s32.totalorder %s125, %s127
      %p131 = scmp.eq.s32.totalorder %s23, 0
      %p132 = por %p130, %p131
      %p133 = scmp.ne.s32.totalorder %s125, %s127
      %p134 = scmp.eq.s32.totalorder %s28, 3
      %p135 = por %p133, %p134
      %p136 = scmp.ne.s32.totalorder %s127, %s128
      %p137 = scmp.eq.s32.totalorder %s28, 0
      %p138 = por %p136, %p137
      %p139 = scmp.ne.s32.totalorder %s127, %s128
      %p140 = scmp.eq.s32.totalorder %s29, 3
      %p141 = por %p139, %p140
      %p143 = scmp.ne.s32.totalorder %s128, %s142
      %p144 = scmp.eq.s32.totalorder %s29, 0
      %p145 = por %p143, %p144
      %s147 = sadd.s32 %s146, 1
      %p150 = scmp.eq.s32.totalorder %s23, 3
      %p151 = scmp.ne.s32.totalorder %s146, %s148
      %p152 = scmp.eq.s32.totalorder %s23, 0
      %p153 = por %p151, %p152
      %p154 = scmp.ne.s32.totalorder %s146, %s148
      %p155 = scmp.eq.s32.totalorder %s28, 3
      %p156 = por %p154, %p155
      %p157 = scmp.ne.s32.totalorder %s148, %s149
      %p158 = scmp.eq.s32.totalorder %s28, 0
      %p159 = por %p157, %p158
      %p160 = scmp.ne.s32.totalorder %s148, %s149
      %p161 = scmp.eq.s32.totalorder %s29, 3
      %p162 = por %p160, %p161
      %p164 = scmp.ne.s32.totalorder %s149, %s163
      %p165 = scmp.eq.s32.totalorder %s29, 0
      %p166 = por %p164, %p165
      %s168 = sadd.s32 %s167, 1
      %p171 = scmp.eq.s32.totalorder %s23, 3
      %p172 = scmp.ne.s32.totalorder %s167, %s169
      %p173 = scmp.eq.s32.totalorder %s23, 0
      %p174 = por %p172, %p173
      %p175 = scmp.ne.s32.totalorder %s167, %s169
      %p176 = scmp.eq.s32.totalorder %s28, 3
      %p177 = por %p175, %p176
      %p178 = scmp.ne.s32.totalorder %s169, %s170
      %p179 = scmp.eq.s32.totalorder %s28, 0
      %p180 = por %p178, %p179
      %p181 = scmp.ne.s32.totalorder %s169, %s170
      %p182 = scmp.eq.s32.totalorder %s29, 3
      %p183 = por %p181, %p182
      %p185 = scmp.ne.s32.totalorder %s170, %s184
      %p186 = scmp.eq.s32.totalorder %s29, 0
      %p187 = por %p185, %p186
      %s188 = ssub.s32 %s23, %s30
      %p189 = scmp.eq.s32.totalorder %s188, 0
      %s191 = sadd.s32 %s190, 1
      %s192 = scalar_select %p189, %s190, %s191
      %p195 = pneg %p189
      %p196 = scmp.eq.s32.totalorder %s23, 3
      %p197 = por %p195, %p196
      %p198 = scmp.ne.s32.totalorder %s190, %s193
      %p199 = scmp.eq.s32.totalorder %s23, 0
      %p200 = por %p198, %p199
      %p201 = scmp.ne.s32.totalorder %s190, %s193
      %p202 = scmp.eq.s32.totalorder %s28, 3
      %p203 = por %p201, %p202
      %p204 = scmp.ne.s32.totalorder %s193, %s194
      %p205 = scmp.eq.s32.totalorder %s28, 0
      %p206 = por %p204, %p205
      %p207 = scmp.ne.s32.totalorder %s193, %s194
      %p208 = scmp.eq.s32.totalorder %s29, 3
      %p209 = por %p207, %p208
      %p211 = scmp.ne.s32.totalorder %s194, %s210
      %p212 = scmp.eq.s32.totalorder %s29, 0
      %p213 = por %p211, %p212
      %p214 = scmp.le.s32.totalorder 1, %s23
      %p215 = scmp.lt.s32.totalorder %s23, 5
      %p216 = pnand %p214, %p215
      %p217 = pneg %p216
      // Predicated region
      $region9: #{tpu_custom_call.1} parent=5 // pred_check
        _
      $region10: #{tpu_custom_call.1} parent=5 // pred_check_branch
        %219 = sbr.rel (%p216) target = $region12
      $region11: #{tpu_custom_call.1} parent=5 // pred_region
        %s220 = ssub.s32 %s23, 1
        // Predicated region
        $region13: #{tpu_custom_call.1} parent=11 // pred_check
          %p221 = pneg %p96
        $region14: #{tpu_custom_call.1} parent=11 // pred_check_branch
          %223 = sbr.rel (%p221) target = $region16
        $region15: #{tpu_custom_call.1} parent=11 // pred_region
          %s225 = ssub.s32 1024, 1024
          %226 = vsyncadd [#allocation6], %s225
          %s227 = sshll.u32 [#allocation7], 4
          %s228 = int_to_ptr.vmem [resolvable:$true] %s227
          %233 = dma.hbm_to_vmem [thread:$0]  %s2, 1024, %s228, [#allocation6], 64, 64, 4
        $region16: #{tpu_custom_call.1} parent=11 // pred_fallthru
          _
        // Predicated region
        $region17: #{tpu_custom_call.1} parent=11 // pred_check
          %p234 = pneg %p117
        $region18: #{tpu_custom_call.1} parent=11 // pred_check_branch
          %236 = sbr.rel (%p234) target = $region20
        $region19: #{tpu_custom_call.1} parent=11 // pred_region
          %s238 = ssub.s32 1024, 1024
          %239 = vsyncadd [#allocation9], %s238
          %s240 = sshll.u32 [#allocation8], 4
          %s241 = int_to_ptr.vmem [resolvable:$true] %s240
          %246 = dma.hbm_to_vmem [thread:$0]  %s3, 1024, %s241, [#allocation9], 64, 64, 4
        $region20: #{tpu_custom_call.1} parent=11 // pred_fallthru
          _
        // Predicated region
        $region21: #{tpu_custom_call.1} parent=11 // pred_check
          %p247 = pneg %p138
        $region22: #{tpu_custom_call.1} parent=11 // pred_check_branch
          %249 = sbr.rel (%p247) target = $region24
        $region23: #{tpu_custom_call.1} parent=11 // pred_region
          _
        $region24: #{tpu_custom_call.1} parent=11 // pred_fallthru
          _
        // Predicated region
        $region25: #{tpu_custom_call.1} parent=11 // pred_check
          %p250 = pneg %p159
        $region26: #{tpu_custom_call.1} parent=11 // pred_check_branch
          %252 = sbr.rel (%p250) target = $region28
        $region27: #{tpu_custom_call.1} parent=11 // pred_region
          %s254 = ssub.s32 1024, 1024
          %255 = vsyncadd [#allocation9], %s254
          %s256 = sshll.u32 [#allocation10], 4
          %s257 = int_to_ptr.vmem [resolvable:$true] %s256
          %262 = dma.hbm_to_vmem [thread:$0]  %s5, 1024, %s257, [#allocation9], 64, 64, 4
        $region28: #{tpu_custom_call.1} parent=11 // pred_fallthru
          _
        // Predicated region
        $region29: #{tpu_custom_call.1} parent=11 // pred_check
          %p263 = pneg %p180
        $region30: #{tpu_custom_call.1} parent=11 // pred_check_branch
          %265 = sbr.rel (%p263) target = $region32
        $region31: #{tpu_custom_call.1} parent=11 // pred_region
          _
        $region32: #{tpu_custom_call.1} parent=11 // pred_fallthru
          _
      $region12: #{tpu_custom_call.1} parent=5 // pred_fallthru
        _
      %p266 = scmp.lt.s32.totalorder %s23, 4
      // Predicated region
      $region33: #{tpu_custom_call.1} parent=5 // pred_check
        %p267 = pneg %p266
      $region34: #{tpu_custom_call.1} parent=5 // pred_check_branch
        %269 = sbr.rel (%p267) target = $region36
      $region35: #{tpu_custom_call.1} parent=5 // pred_region
        // Predicated region
        $region37: #{tpu_custom_call.1} parent=35 // pred_check
          %p270 = pneg %p43
        $region38: #{tpu_custom_call.1} parent=35 // pred_check_branch
          %272 = sbr.rel (%p270) target = $region40
        $region39: #{tpu_custom_call.1} parent=35 // pred_region
          %s273 = sand.u32 %s33, 1
          %s274 = scalar_lea.sflag [#allocation3], %s273
          %s275 = sand.u32 %s33, 1
          %s276 = smul.addr %s275, 16
          %s277 = scalar_lea.vmem [#allocation2], %s276
          %s279 = ssub.s32 256, 256
          %280 = vsyncadd %s274, %s279
          %s281 = smul.addr %s23, 2
          %s282 = smul.addr %s281, 128
          %s283 = scalar_lea.hbm %s0, %s282
          %s284 = sshll.u32 %s277, 4
          %s285 = int_to_ptr.vmem [resolvable:$true] %s284
          %290 = dma.hbm_to_vmem [thread:$0]  %s283, 256, %s285, %s274, 128, 128, 8
        $region40: #{tpu_custom_call.1} parent=35 // pred_fallthru
          _
        // Predicated region
        $region41: #{tpu_custom_call.1} parent=35 // pred_check
          %p291 = pneg %p69
        $region42: #{tpu_custom_call.1} parent=35 // pred_check_branch
          %293 = sbr.rel (%p291) target = $region44
        $region43: #{tpu_custom_call.1} parent=35 // pred_region
          %s294 = sand.u32 %s23, 1
          %s295 = scalar_lea.sflag [#allocation6], %s294
          %s296 = sand.u32 %s59, 1
          %s297 = smul.addr %s296, 16
          %s298 = scalar_lea.vmem [#allocation5], %s297
          %s300 = ssub.s32 256, 256
          %301 = vsyncadd %s295, %s300
          %s302 = smul.addr %s23, 2
          %s303 = smul.addr %s302, 128
          %s304 = scalar_lea.hbm %s1, %s303
          %s305 = sshll.u32 %s298, 4
          %s306 = int_to_ptr.vmem [resolvable:$true] %s305
          %311 = dma.hbm_to_vmem [thread:$0]  %s304, 256, %s306, %s295, 128, 128, 8
        $region44: #{tpu_custom_call.1} parent=35 // pred_fallthru
          _
      $region36: #{tpu_custom_call.1} parent=5 // pred_fallthru
        _
      %p312 = scmp.le.s32.totalorder 1, %s23
      %p313 = scmp.lt.s32.totalorder %s23, 5
      %p314 = pnand %p312, %p313
      %p315 = pneg %p314
      // Predicated region
      $region45: #{tpu_custom_call.1} parent=5 // pred_check
        _
      $region46: #{tpu_custom_call.1} parent=5 // pred_check_branch
        %317 = sbr.rel (%p314) target = $region48
      $region47: #{tpu_custom_call.1} parent=5 // pred_region
        %s318 = ssub.s32 %s23, 1
        %s319 = sand.u32 %s36, 1
        %s320 = scalar_lea.sflag [#allocation3], %s319
        %s321 = sand.u32 %s36, 1
        %s322 = smul.addr %s321, 16
        %s323 = scalar_lea.vmem [#allocation2], %s322
        // Predicated region
        $region49: #{tpu_custom_call.1} parent=47 // pred_check
          %p324 = pneg %p49
        $region50: #{tpu_custom_call.1} parent=47 // pred_check_branch
          %326 = sbr.rel (%p324) target = $region52
        $region51: #{tpu_custom_call.1} parent=47 // pred_region
          %327 = dma.done %s320, 256
        $region52: #{tpu_custom_call.1} parent=47 // pred_fallthru
          _
        %s328 = sand.u32 %s28, 1
        %s329 = scalar_lea.sflag [#allocation6], %s328
        %s330 = sand.u32 %s62, 1
        %s331 = smul.addr %s330, 16
        %s332 = scalar_lea.vmem [#allocation5], %s331
        // Predicated region
        $region53: #{tpu_custom_call.1} parent=47 // pred_check
          %p333 = pneg %p75
        $region54: #{tpu_custom_call.1} parent=47 // pred_check_branch
          %335 = sbr.rel (%p333) target = $region56
        $region55: #{tpu_custom_call.1} parent=47 // pred_region
          %336 = dma.done %s329, 256
        $region56: #{tpu_custom_call.1} parent=47 // pred_fallthru
          _
        // Predicated region
        $region57: #{tpu_custom_call.1} parent=47 // pred_check
          %p337 = pneg %p96
        $region58: #{tpu_custom_call.1} parent=47 // pred_check_branch
          %339 = sbr.rel (%p337) target = $region60
        $region59: #{tpu_custom_call.1} parent=47 // pred_region
          %340 = dma.done [#allocation6], 1024
        $region60: #{tpu_custom_call.1} parent=47 // pred_fallthru
          _
        // Predicated region
        $region61: #{tpu_custom_call.1} parent=47 // pred_check
          %p341 = pneg %p117
        $region62: #{tpu_custom_call.1} parent=47 // pred_check_branch
          %343 = sbr.rel (%p341) target = $region64
        $region63: #{tpu_custom_call.1} parent=47 // pred_region
          %344 = dma.done [#allocation9], 1024
        $region64: #{tpu_custom_call.1} parent=47 // pred_fallthru
          _
        // Predicated region
        $region65: #{tpu_custom_call.1} parent=47 // pred_check
          %p345 = pneg %p159
        $region66: #{tpu_custom_call.1} parent=47 // pred_check_branch
          %347 = sbr.rel (%p345) target = $region68
        $region67: #{tpu_custom_call.1} parent=47 // pred_region
          %348 = dma.done [#allocation9], 1024
        $region68: #{tpu_custom_call.1} parent=47 // pred_fallthru
          _
        %s349 = sand.u32 %s36, 1
        %s350 = scalar_lea.sflag [#allocation3], %s349
        %s351 = sand.u32 %s36, 1
        %s352 = smul.addr %s351, 16
        %s353 = scalar_lea.vmem [#allocation2], %s352
        %p354 = pneg %p49
        %p355 = pneg %p46
        %s356 = sand.u32 %s28, 1
        %s357 = scalar_lea.sflag [#allocation6], %s356
        %s358 = sand.u32 %s62, 1
        %s359 = smul.addr %s358, 16
        %s360 = scalar_lea.vmem [#allocation5], %s359
        %p361 = pneg %p75
        %p362 = pneg %p72
        %p363 = pneg %p96
        %p364 = pneg %p93
        %p365 = pneg %p117
        %p366 = pneg %p114
        %p367 = pneg %p138
        %p368 = pneg %p135
        %p369 = pneg %p159
        %p370 = pneg %p156
        %p371 = pneg %p180
        %p372 = pneg %p177
        %p373 = pneg %p206
        %p374 = pneg %p203
        %s375 = sand.u32 %s193, 1
        %s376 = scalar_lea.sflag [#allocation4], %s375
        %s377 = sand.u32 %s193, 1
        %s378 = smul.addr %s377, 16
        %s379 = scalar_lea.vmem [#allocation11], %s378
        %v381 = vld [vmem:[%s323] sm:$0xff]
        %v382 = vld [vmem:[%s323 + $0x8] sm:$0xff]
        %v383 = vpack.c.bf16 %v382, %v381
        %v384 = vld [vmem:[%s332] sm:$0xff]
        %v385 = vld [vmem:[%s332 + $0x8] sm:$0xff]
        %v386 = vpack.c.bf16 %v385, %v384
        %v387 = vld [vmem:[#allocation7] sm:$0xf]
        %v388 = vld [vmem:[#allocation7 + $0x4] sm:$0xf]
        %v389 = vld [vmem:[#allocation7 + $0x8] sm:$0xf]
        %v390 = vld [vmem:[#allocation7 + $0xc] sm:$0xf]
        %v391 = vld [vmem:[#allocation7 + $0x10] sm:$0xf]
        %v392 = vld [vmem:[#allocation7 + $0x14] sm:$0xf]
        %v393 = vld [vmem:[#allocation7 + $0x18] sm:$0xf]
        %v394 = vld [vmem:[#allocation7 + $0x1c] sm:$0xf]
        %v395 = vld [vmem:[#allocation7 + $0x20] sm:$0xf]
        %v396 = vld [vmem:[#allocation7 + $0x24] sm:$0xf]
        %v397 = vld [vmem:[#allocation7 + $0x28] sm:$0xf]
        %v398 = vld [vmem:[#allocation7 + $0x2c] sm:$0xf]
        %v399 = vld [vmem:[#allocation7 + $0x30] sm:$0xf]
        %v400 = vld [vmem:[#allocation7 + $0x34] sm:$0xf]
        %v401 = vld [vmem:[#allocation7 + $0x38] sm:$0xf]
        %v402 = vld [vmem:[#allocation7 + $0x3c] sm:$0xf]
        %v403 = vld [vmem:[#allocation8] sm:$0xf]
        %v404 = vld [vmem:[#allocation8 + $0x4] sm:$0xf]
        %v405 = vld [vmem:[#allocation8 + $0x8] sm:$0xf]
        %v406 = vld [vmem:[#allocation8 + $0xc] sm:$0xf]
        %v407 = vld [vmem:[#allocation8 + $0x10] sm:$0xf]
        %v408 = vld [vmem:[#allocation8 + $0x14] sm:$0xf]
        %v409 = vld [vmem:[#allocation8 + $0x18] sm:$0xf]
        %v410 = vld [vmem:[#allocation8 + $0x1c] sm:$0xf]
        %v411 = vld [vmem:[#allocation8 + $0x20] sm:$0xf]
        %v412 = vld [vmem:[#allocation8 + $0x24] sm:$0xf]
        %v413 = vld [vmem:[#allocation8 + $0x28] sm:$0xf]
        %v414 = vld [vmem:[#allocation8 + $0x2c] sm:$0xf]
        %v415 = vld [vmem:[#allocation8 + $0x30] sm:$0xf]
        %v416 = vld [vmem:[#allocation8 + $0x34] sm:$0xf]
        %v417 = vld [vmem:[#allocation8 + $0x38] sm:$0xf]
        %v418 = vld [vmem:[#allocation8 + $0x3c] sm:$0xf]
        %v435 = vunpack.c.l.b16 %v403
        %v436 = vunpack.c.l.b16 %v404
        %v437 = vunpack.c.l.b16 %v405
        %v438 = vunpack.c.l.b16 %v406
        %v439 = vunpack.c.l.b16 %v407
        %v440 = vunpack.c.l.b16 %v408
        %v441 = vunpack.c.l.b16 %v409
        %v442 = vunpack.c.l.b16 %v410
        %v443 = vunpack.c.l.b16 %v411
        %v444 = vunpack.c.l.b16 %v412
        %v445 = vunpack.c.l.b16 %v413
        %v446 = vunpack.c.l.b16 %v414
        %v447 = vunpack.c.l.b16 %v415
        %v448 = vunpack.c.l.b16 %v416
        %v449 = vunpack.c.l.b16 %v417
        %v450 = vunpack.c.l.b16 %v418
        %v451 = vpack.c.b16 %v436, %v435
        %v452 = vpack.c.b16 %v438, %v437
        %v453 = vpack.c.b16 %v440, %v439
        %v454 = vpack.c.b16 %v442, %v441
        %v455 = vpack.c.b16 %v444, %v443
        %v456 = vpack.c.b16 %v446, %v445
        %v457 = vpack.c.b16 %v448, %v447
        %v458 = vpack.c.b16 %v450, %v449
        %467 = vmatprep.subr.bf16.mxu0 0
        %468 = vmatpush1.bf16.msra.mxu0 %v451
        %469 = vmatprep.subr.bf16.mxu0 0
        %470 = vmatpush1.bf16.msra.mxu0 %v452
        %471 = vmatprep.subr.bf16.mxu0 0
        %472 = vmatpush1.bf16.msra.mxu0 %v453
        %473 = vmatprep.subr.bf16.mxu0 0
        %474 = vmatpush1.bf16.msra.mxu0 %v454
        %475 = vmatprep.subr.bf16.mxu0 0
        %476 = vmatpush1.bf16.msra.mxu0 %v455
        %477 = vmatprep.subr.bf16.mxu0 0
        %478 = vmatpush1.bf16.msra.mxu0 %v456
        %479 = vmatprep.subr.bf16.mxu0 0
        %480 = vmatpush1.bf16.msra.mxu0 %v457
        %481 = vmatprep.subr.bf16.mxu0 0
        %482 = vmatpush1.bf16.msra.mxu0 %v458
        %483 = vmatprep.subr.bf16.mxu0 0
        %484 = vmatpush1.bf16.msra.mxu0 0
        %485 = vmatprep.subr.bf16.mxu0 0
        %486 = vmatpush1.bf16.msra.mxu0 0
        %487 = vmatprep.subr.bf16.mxu0 0
        %488 = vmatpush1.bf16.msra.mxu0 0
        %489 = vmatprep.subr.bf16.mxu0 0
        %490 = vmatpush1.bf16.msra.mxu0 0
        %491 = vmatprep.subr.bf16.mxu0 0
        %492 = vmatpush1.bf16.msra.mxu0 0
        %493 = vmatprep.subr.bf16.mxu0 0
        %494 = vmatpush1.bf16.msra.mxu0 0
        %495 = vmatprep.subr.bf16.mxu0 0
        %496 = vmatpush1.bf16.msra.mxu0 0
        %497 = vmatprep.subr.bf16.mxu0 0
        %498 = vmatpush1.bf16.msra.mxu0 0
        %499 = vmatprep.mubr.bf16.mxu0 0
        %500 = vmatmul.mubr.bf16.gmra.mrb[0].mxu0 %v386
        %v501 = vpop.f32.mrb[0].mxu0
        %v502 = vadd.f32 0.0, %v501
        %v503 = vpop.f32.mrb[0].mxu0
        %v504 = vpop.f32.mrb[0].mxu0
        %v505 = vadd.f32 0.0, %v504
        %v506 = vpop.f32.mrb[0].mxu0
        %507 = vdwg.mxu0
        %v524 = vunpack.c.l.b16 %v387
        %v525 = vunpack.c.l.b16 %v388
        %v526 = vunpack.c.l.b16 %v389
        %v527 = vunpack.c.l.b16 %v390
        %v528 = vunpack.c.l.b16 %v391
        %v529 = vunpack.c.l.b16 %v392
        %v530 = vunpack.c.l.b16 %v393
        %v531 = vunpack.c.l.b16 %v394
        %v532 = vunpack.c.l.b16 %v395
        %v533 = vunpack.c.l.b16 %v396
        %v534 = vunpack.c.l.b16 %v397
        %v535 = vunpack.c.l.b16 %v398
        %v536 = vunpack.c.l.b16 %v399
        %v537 = vunpack.c.l.b16 %v400
        %v538 = vunpack.c.l.b16 %v401
        %v539 = vunpack.c.l.b16 %v402
        %v540 = vpack.c.b16 %v525, %v524
        %v541 = vpack.c.b16 %v527, %v526
        %v542 = vpack.c.b16 %v529, %v528
        %v543 = vpack.c.b16 %v531, %v530
        %v544 = vpack.c.b16 %v533, %v532
        %v545 = vpack.c.b16 %v535, %v534
        %v546 = vpack.c.b16 %v537, %v536
        %v547 = vpack.c.b16 %v539, %v538
        %556 = vmatprep.subr.bf16.mxu0 0
        %557 = vmatpush1.bf16.msra.mxu0 %v540
        %558 = vmatprep.subr.bf16.mxu0 0
        %559 = vmatpush1.bf16.msra.mxu0 %v541
        %560 = vmatprep.subr.bf16.mxu0 0
        %561 = vmatpush1.bf16.msra.mxu0 %v542
        %562 = vmatprep.subr.bf16.mxu0 0
        %563 = vmatpush1.bf16.msra.mxu0 %v543
        %564 = vmatprep.subr.bf16.mxu0 0
        %565 = vmatpush1.bf16.msra.mxu0 %v544
        %566 = vmatprep.subr.bf16.mxu0 0
        %567 = vmatpush1.bf16.msra.mxu0 %v545
        %568 = vmatprep.subr.bf16.mxu0 0
        %569 = vmatpush1.bf16.msra.mxu0 %v546
        %570 = vmatprep.subr.bf16.mxu0 0
        %571 = vmatpush1.bf16.msra.mxu0 %v547
        %572 = vmatprep.subr.bf16.mxu0 0
        %573 = vmatpush1.bf16.msra.mxu0 0
        %574 = vmatprep.subr.bf16.mxu0 0
        %575 = vmatpush1.bf16.msra.mxu0 0
        %576 = vmatprep.subr.bf16.mxu0 0
        %577 = vmatpush1.bf16.msra.mxu0 0
        %578 = vmatprep.subr.bf16.mxu0 0
        %579 = vmatpush1.bf16.msra.mxu0 0
        %580 = vmatprep.subr.bf16.mxu0 0
        %581 = vmatpush1.bf16.msra.mxu0 0
        %582 = vmatprep.subr.bf16.mxu0 0
        %583 = vmatpush1.bf16.msra.mxu0 0
        %584 = vmatprep.subr.bf16.mxu0 0
        %585 = vmatpush1.bf16.msra.mxu0 0
        %586 = vmatprep.subr.bf16.mxu0 0
        %587 = vmatpush1.bf16.msra.mxu0 0
        %588 = vmatprep.mubr.bf16.mxu0 0
        %589 = vmatmul.mubr.bf16.gmra.mrb[0].mxu0 %v383
        %v590 = vpop.f32.mrb[0].mxu0
        %v591 = vadd.f32 %v502, %v590
        %v592 = vpop.f32.mrb[0].mxu0
        %v593 = vpop.f32.mrb[0].mxu0
        %v594 = vadd.f32 %v505, %v593
        %v595 = vpop.f32.mrb[0].mxu0
        %596 = vdwg.mxu0
        %v597 = vld [vmem:[%s4] sm:$0x1]
        %v599 = vlaneseq
        %v600 = vshrl.u32 %v599, 7
        %v601 = vsub.s32 0, %v600
        %v602 = vrot.slane %v597, %v601
        %v604 = vadd.f32 %v591, %v602
        %v605 = vadd.f32 %v594, %v602
        %v606 = vmax.f32 %v604, 0.0
        %v607 = vmax.f32 %v605, 0.0
        %v608 = vadd.f32 %v606, %v607
        %v609 = vrot.slane %v608, 4
        %v610 = vadd.f32 %v608, %v609
        %v611 = vrot.slane %v610, 2
        %v612 = vadd.f32 %v610, %v611
        %v613 = vrot.slane %v612, 1
        %v614 = vadd.f32 %v612, %v613
        %v615 = vrcp.pop 16.0
        %v616 = vmul.f32 %v614, %v615
        %v617 = vmul.f32 %v606, %v606
        %v618 = vmul.f32 %v607, %v607
        %v619 = vadd.f32 %v617, %v618
        %v620 = vrot.slane %v619, 4
        %v621 = vadd.f32 %v619, %v620
        %v622 = vrot.slane %v621, 2
        %v623 = vadd.f32 %v621, %v622
        %v624 = vrot.slane %v623, 1
        %v625 = vadd.f32 %v623, %v624
        %v626 = vmul.f32 %v625, %v615
        %v627 = vmul.f32 %v616, %v616
        %v628 = vsub.f32 %v626, %v627
        %v629 = vmax.f32 %v628, 0.0
        %v630 = vsub.f32 %v606, %v616
        %v631 = vsub.f32 %v607, %v616
        %v632 = vadd.f32 %v629, 1e-05
        %v633 = vrsqrt.pop %v632
        %v634 = vmul.f32 %v630, %v633
        %v635 = vmul.f32 %v631, %v633
        %v636 = vpack.c.bf16 %v635, %v634
        %v637 = vld [vmem:[#allocation10] sm:$0xf]
        %v638 = vld [vmem:[#allocation10 + $0x4] sm:$0xf]
        %v639 = vld [vmem:[#allocation10 + $0x8] sm:$0xf]
        %v640 = vld [vmem:[#allocation10 + $0xc] sm:$0xf]
        %v641 = vld [vmem:[#allocation10 + $0x10] sm:$0xf]
        %v642 = vld [vmem:[#allocation10 + $0x14] sm:$0xf]
        %v643 = vld [vmem:[#allocation10 + $0x18] sm:$0xf]
        %v644 = vld [vmem:[#allocation10 + $0x1c] sm:$0xf]
        %v645 = vld [vmem:[#allocation10 + $0x20] sm:$0xf]
        %v646 = vld [vmem:[#allocation10 + $0x24] sm:$0xf]
        %v647 = vld [vmem:[#allocation10 + $0x28] sm:$0xf]
        %v648 = vld [vmem:[#allocation10 + $0x2c] sm:$0xf]
        %v649 = vld [vmem:[#allocation10 + $0x30] sm:$0xf]
        %v650 = vld [vmem:[#allocation10 + $0x34] sm:$0xf]
        %v651 = vld [vmem:[#allocation10 + $0x38] sm:$0xf]
        %v652 = vld [vmem:[#allocation10 + $0x3c] sm:$0xf]
        %v653 = vld [vmem:[%s6] sm:$0x1]
        %v655 = vlaneseq
        %v656 = vshrl.u32 %v655, 7
        %v657 = vsub.s32 0, %v656
        %v658 = vrot.slane %v653, %v657
        %v676 = vunpack.c.l.b16 %v637
        %v677 = vunpack.c.l.b16 %v638
        %v678 = vunpack.c.l.b16 %v639
        %v679 = vunpack.c.l.b16 %v640
        %v680 = vunpack.c.l.b16 %v641
        %v681 = vunpack.c.l.b16 %v642
        %v682 = vunpack.c.l.b16 %v643
        %v683 = vunpack.c.l.b16 %v644
        %v684 = vunpack.c.l.b16 %v645
        %v685 = vunpack.c.l.b16 %v646
        %v686 = vunpack.c.l.b16 %v647
        %v687 = vunpack.c.l.b16 %v648
        %v688 = vunpack.c.l.b16 %v649
        %v689 = vunpack.c.l.b16 %v650
        %v690 = vunpack.c.l.b16 %v651
        %v691 = vunpack.c.l.b16 %v652
        %v692 = vpack.c.b16 %v677, %v676
        %v693 = vpack.c.b16 %v679, %v678
        %v694 = vpack.c.b16 %v681, %v680
        %v695 = vpack.c.b16 %v683, %v682
        %v696 = vpack.c.b16 %v685, %v684
        %v697 = vpack.c.b16 %v687, %v686
        %v698 = vpack.c.b16 %v689, %v688
        %v699 = vpack.c.b16 %v691, %v690
        %708 = vmatprep.subr.bf16.mxu0 0
        %709 = vmatpush1.bf16.msra.mxu0 %v692
        %710 = vmatprep.subr.bf16.mxu0 0
        %711 = vmatpush1.bf16.msra.mxu0 %v693
        %712 = vmatprep.subr.bf16.mxu0 0
        %713 = vmatpush1.bf16.msra.mxu0 %v694
        %714 = vmatprep.subr.bf16.mxu0 0
        %715 = vmatpush1.bf16.msra.mxu0 %v695
        %716 = vmatprep.subr.bf16.mxu0 0
        %717 = vmatpush1.bf16.msra.mxu0 %v696
        %718 = vmatprep.subr.bf16.mxu0 0
        %719 = vmatpush1.bf16.msra.mxu0 %v697
        %720 = vmatprep.subr.bf16.mxu0 0
        %721 = vmatpush1.bf16.msra.mxu0 %v698
        %722 = vmatprep.subr.bf16.mxu0 0
        %723 = vmatpush1.bf16.msra.mxu0 %v699
        %724 = vmatprep.subr.bf16.mxu0 0
        %725 = vmatpush1.bf16.msra.mxu0 0
        %726 = vmatprep.subr.bf16.mxu0 0
        %727 = vmatpush1.bf16.msra.mxu0 0
        %728 = vmatprep.subr.bf16.mxu0 0
        %729 = vmatpush1.bf16.msra.mxu0 0
        %730 = vmatprep.subr.bf16.mxu0 0
        %731 = vmatpush1.bf16.msra.mxu0 0
        %732 = vmatprep.subr.bf16.mxu0 0
        %733 = vmatpush1.bf16.msra.mxu0 0
        %734 = vmatprep.subr.bf16.mxu0 0
        %735 = vmatpush1.bf16.msra.mxu0 0
        %736 = vmatprep.subr.bf16.mxu0 0
        %737 = vmatpush1.bf16.msra.mxu0 0
        %738 = vmatprep.subr.bf16.mxu0 0
        %739 = vmatpush1.bf16.msra.mxu0 0
        %740 = vmatprep.mubr.bf16.mxu0 0
        %741 = vmatmul.mubr.bf16.gmra.mrb[0].mxu0 %v636
        %v742 = vpop.f32.mrb[0].mxu0
        %v743 = vadd.f32 %v658, %v742
        %v744 = vpop.f32.mrb[0].mxu0
        %v745 = vpop.f32.mrb[0].mxu0
        %v746 = vadd.f32 %v658, %v745
        %v747 = vpop.f32.mrb[0].mxu0
        %748 = vdwg.mxu0
        %v749 = vmax.f32 %v743, 0.0
        %v750 = vmax.f32 %v746, 0.0
        %751 = vst [vmem:[%s379] sm:$0xff] %v749
        %752 = vst [vmem:[%s379 + $0x8] sm:$0xff] %v750
        %s753 = sand.u32 %s193, 1
        %s754 = scalar_lea.sflag [#allocation4], %s753
        %s755 = sand.u32 %s193, 1
        %s756 = smul.addr %s755, 16
        %s757 = scalar_lea.vmem [#allocation11], %s756
        // Predicated region
        $region69: #{tpu_custom_call.1} parent=47 // pred_check
          %p758 = pneg %p203
        $region70: #{tpu_custom_call.1} parent=47 // pred_check_branch
          %760 = sbr.rel (%p758) target = $region72
        $region71: #{tpu_custom_call.1} parent=47 // pred_region
          %s762 = ssub.s32 256, 256
          %763 = vsyncadd %s754, %s762
          %s764 = smul.addr %s28, 2
          %s765 = smul.addr %s764, 128
          %s766 = scalar_lea.hbm %s7, %s765
          %s767 = sshll.u32 %s757, 4
          %s768 = int_to_ptr.vmem [resolvable:$true] %s767
          %773 = dma.vmem_to_hbm [thread:$0]  %s768, 256, %s766, %s754, 128, 128, 8
        $region72: #{tpu_custom_call.1} parent=47 // pred_fallthru
          _
      $region48: #{tpu_custom_call.1} parent=5 // pred_fallthru
        _
      %p774 = scmp.le.s32.totalorder 2, %s23
      // Predicated region
      $region73: #{tpu_custom_call.1} parent=5 // pred_check
        %p775 = pneg %p774
      $region74: #{tpu_custom_call.1} parent=5 // pred_check_branch
        %777 = sbr.rel (%p775) target = $region76
      $region75: #{tpu_custom_call.1} parent=5 // pred_region
        %s778 = ssub.s32 %s23, 2
        // Predicated region
        $region77: #{tpu_custom_call.1} parent=75 // pred_check
          %p779 = pneg %p209
        $region78: #{tpu_custom_call.1} parent=75 // pred_check_branch
          %781 = sbr.rel (%p779) target = $region80
        $region79: #{tpu_custom_call.1} parent=75 // pred_region
          %s782 = sand.u32 %s194, 1
          %s783 = scalar_lea.sflag [#allocation4], %s782
          %s784 = sand.u32 %s194, 1
          %s785 = smul.addr %s784, 16
          %s786 = scalar_lea.vmem [#allocation11], %s785
          %787 = dma.done %s783, 256
        $region80: #{tpu_custom_call.1} parent=75 // pred_fallthru
          _
      $region76: #{tpu_custom_call.1} parent=5 // pred_fallthru
        _
    $region6: #{tpu_custom_call.1} parent=1 // loop_footer
      %s27 = sadd.s32 1, %s23
    $region7: #{tpu_custom_call.1} parent=1 // loop_footer_branch
      %22 = sbr.rel target = $region3
    $region8: #{tpu_custom_call.1} parent=1 // loop_exit
      _
    %788 = vsyncpa [#allocation3], 1
    %s789 = scalar_lea.sflag [#allocation3], 1
    %790 = vsyncpa %s789, 1
    %791 = vsyncpa [#allocation6], 1
    %s792 = scalar_lea.sflag [#allocation6], 1
    %793 = vsyncpa %s792, 1
    %794 = vsyncpa [#allocation9], 1
    %795 = vsyncpa [#allocation4], 1
    %s796 = scalar_lea.sflag [#allocation4], 1
    %797 = vsyncpa %s796, 1

</llo_original>
